<compile_context>
chip_gen: v7x
topology: tpu7x:2x2x1
jax: 0.10.0
libtpu: 0.0.40
codegen_flags: <defaults>
</compile_context>

<pallas_src>
import jax
import jax.numpy as jnp
from jax.experimental import pallas as pl
from jax.experimental.pallas import tpu as pltpu

_LANE = 128
_SUBLANE = 8


def _round_up(x, m):
    return ((x + m - 1) // m) * m


# ---------------------------------------------------------------------------
# One-time parameter preparation (fold tables into linear 1, heads into linear 2)
# ---------------------------------------------------------------------------
def prepare_fused_params(params, context_vars):
    """Fold embedding tables / classification heads into the two MLP matmuls.

    Returns a dict of kernel-ready arrays (bf16 weights, f32 biases) plus static
    metadata (offsets, sizes).  Call once; reuse across forward calls.
    """
    names = tuple(context_vars)
    cats = tuple(int(context_vars[n]) for n in names)
    n_vars = len(names)

    hidden = params["w1"].shape[1]
    emb_dim = params["w2"].shape[1]

    w1 = params["w1"].astype(jnp.float32)                 # (n_vars*emb_dim, hidden)
    b1 = params["b1"].astype(jnp.float32).reshape(1, hidden)
    w2 = params["w2"].astype(jnp.float32)                 # (hidden, emb_dim)
    b2 = params["b2"].astype(jnp.float32)                 # (emb_dim,)

    # one-hot column offsets per context variable
    offsets = [0] * n_vars
    for i in range(1, n_vars):
        offsets[i] = offsets[i - 1] + cats[i - 1]
    total_cat = sum(cats)
    tc_pad = _round_up(max(total_cat, _SUBLANE), 16)      # bf16 sublane-friendly

    # Fold each embedding table into its slice of w1 (f32 compute, cast to bf16):
    #   (gathered embeddings) @ w1  ==  onehot @ wcat
    wcat = jnp.zeros((tc_pad, hidden), jnp.float32)
    for i, n in enumerate(names):
        tbl = params["emb"][n].astype(jnp.float32)        # (n_cat, emb_dim)
        w1_v = w1[i * emb_dim:(i + 1) * emb_dim, :]       # (emb_dim, hidden)
        wcat = wcat.at[offsets[i]:offsets[i] + cats[i], :].set(
            jnp.dot(tbl, w1_v, preferred_element_type=jnp.float32))

    # Fold classification heads into the second matmul (f32 first, then cast):
    #   (h @ w2 + b2) @ wh + bh == h @ (w2 @ wh) + (b2 @ wh + bh)
    wh = jnp.concatenate([params["heads"][n][0].astype(jnp.float32) for n in names], axis=1)
    bh = jnp.concatenate([params["heads"][n][1].astype(jnp.float32) for n in names], axis=0)
    wh_fused = jnp.dot(w2, wh, preferred_element_type=jnp.float32)        # (hidden, total_cat)
    bh_fused = jnp.dot(b2, wh, preferred_element_type=jnp.float32) + bh   # (total_cat,)

    # Lane-dense combined output: [ emb | logits | zero pad ] to a multiple of 128.
    n_out = emb_dim + total_cat
    n_pad = _round_up(n_out, _LANE)
    w_out = jnp.zeros((hidden, n_pad), jnp.float32)
    w_out = w_out.at[:, :emb_dim].set(w2).at[:, emb_dim:n_out].set(wh_fused)
    b_out = jnp.zeros((1, n_pad), jnp.float32)
    b_out = b_out.at[0, :emb_dim].set(b2).at[0, emb_dim:n_out].set(bh_fused)

    return {
        "names": names,
        "cats": cats,
        "offsets": tuple(offsets),
        "emb_dim": emb_dim,
        "hidden": hidden,
        "tc_pad": tc_pad,
        "n_pad": n_pad,
        "n_out": n_out,
        "wcat": wcat.astype(jnp.bfloat16),   # (tc_pad, hidden)  bf16 MXU operand
        "b1": b1,                            # (1, hidden)       f32
        "w_out": w_out.astype(jnp.bfloat16), # (hidden, n_pad)   bf16 MXU operand
        "b_out": b_out,                      # (1, n_pad)        f32
    }


# ---------------------------------------------------------------------------
# Forward pass
# ---------------------------------------------------------------------------
def context_module_forward(context_indices, fused, *, tile_b=1024):
    """JAX/Pallas equivalent of ContextModule.forward using prepared params.

    Args:
      context_indices: dict {var_name: int array of shape (B,)}
      fused: output of prepare_fused_params()
      tile_b: target batch tile (clamped so large B gives >= 2 grid tiles).
    Returns:
      embedding: (B, emb_dim) f32
      classification_logits: dict {var_name: (B, n_cat)} f32
    """
    names = fused["names"]
    cats = fused["cats"]
    offsets = fused["offsets"]
    n_vars = len(names)
    hidden, tc_pad, n_pad = fused["hidden"], fused["tc_pad"], fused["n_pad"]
    emb_dim = fused["emb_dim"]

    # Stream only the int32 indices: (B, n_vars).
    idx = jnp.stack([context_indices[n].astype(jnp.int32) for n in names], axis=1)
    B = idx.shape[0]

    # Batch tiling: big tiles to amortize ~0.35 us/step grid overhead, but at
    # most ceil(B/2) so the "parallel" axis has >= 2 tiles for v7x's 2 TCs.
    tile_b = max(_SUBLANE, min(int(tile_b), _round_up(pl.cdiv(B, 2), _SUBLANE)))
    tile_b = _round_up(tile_b, _SUBLANE)
    b_pad = _round_up(B, tile_b)
    num_tiles = b_pad // tile_b
    if b_pad != B:
        # Pad batch only (index 0 is always valid; padded rows are sliced off).
        idx = jnp.pad(idx, ((0, b_pad - B), (0, 0)))

    def kernel(idx_ref, wcat_ref, b1_ref, wout_ref, bout_ref, out_ref):
        # Build the combined one-hot row selector for all context variables.
        idx_v = idx_ref[...]                                          # (TB, n_vars) i32
        lane = jax.lax.broadcasted_iota(jnp.int32, (tile_b, tc_pad), 1)
        onehot = jnp.zeros((tile_b, tc_pad), jnp.float32)
        for v in range(n_vars):                                       # static, tiny
            onehot = onehot + (lane == idx_v[:, v:v + 1] + offsets[v]).astype(jnp.float32)
        # Linear 1 (embedding tables pre-folded in) + ReLU.
        h = jnp.dot(onehot.astype(jnp.bfloat16), wcat_ref[...],
                    preferred_element_type=jnp.float32)
        h = jnp.maximum(h + b1_ref[...], 0.0)
        # Linear 2 with classification heads pre-folded in.
        out_ref[...] = (jnp.dot(h.astype(jnp.bfloat16), wout_ref[...],
                                preferred_element_type=jnp.float32)
                        + bout_ref[...])

    # Honest VMEM accounting: pipeliner double-buffers every input spec (even
    # constant-index weights); biases padded to a sublane; intermediates headroom.
    vmem_bytes = (2 * tile_b * n_vars * 4                       # idx tiles
                  + 2 * tile_b * n_pad * 4                      # out tiles
                  + 2 * tc_pad * hidden * 2                     # wcat (bf16)
                  + 2 * hidden * n_pad * 2                      # w_out (bf16)
                  + 2 * _SUBLANE * (hidden + n_pad) * 4         # biases
                  + 4 * tile_b * (tc_pad + hidden))             # onehot / h scratch
    vmem_limit = int(min(max(2 * vmem_bytes, 16 << 20), 32 << 20))  # <=32 MiB (v7x headroom)

    cost = pl.CostEstimate(
        flops=2 * b_pad * (tc_pad * hidden + hidden * n_pad),
        transcendentals=0,
        bytes_accessed=(4 * b_pad * (n_vars + n_pad)
                        + 2 * (tc_pad * hidden + hidden * n_pad)
                        + 4 * (hidden + n_pad)),
    )

    out = pl.pallas_call(
        kernel,
        out_shape=jax.ShapeDtypeStruct((b_pad, n_pad), jnp.float32),
        grid=(num_tiles,),
        in_specs=[
            pl.BlockSpec((tile_b, n_vars), lambda i: (i, 0)),   # indices: streamed per tile
            pl.BlockSpec((tc_pad, hidden), lambda i: (0, 0)),   # fused tables: VMEM-resident
            pl.BlockSpec((1, hidden), lambda i: (0, 0)),
            pl.BlockSpec((hidden, n_pad), lambda i: (0, 0)),    # fused w2|heads: VMEM-resident
            pl.BlockSpec((1, n_pad), lambda i: (0, 0)),
        ],
        out_specs=pl.BlockSpec((tile_b, n_pad), lambda i: (i, 0)),
        compiler_params=pltpu.CompilerParams(
            dimension_semantics=("parallel",),   # megacore-shardable batch axis
            vmem_limit_bytes=vmem_limit,
        ),
        cost_estimate=cost,
    )(idx, fused["wcat"], fused["b1"], fused["w_out"], fused["b_out"])

    out = out[:B]                                 # drop padded batch rows
    embedding = out[:, :emb_dim]
    classification_logits = {}
    off = emb_dim
    for name, n_cat in zip(names, cats):
        classification_logits[name] = out[:, off:off + n_cat]
        off += n_cat
    return embedding, classification_logits


# ---------------------------------------------------------------------------
# Parameter init mirroring the PyTorch module + pure-JAX reference
# ---------------------------------------------------------------------------
def init_params(key, context_vars, embedding_dim, hidden=128):
    params = {"emb": {}, "heads": {}}
    total_dim = len(context_vars) * embedding_dim

    keys = jax.random.split(key, 2 * len(context_vars) + 4)
    k_iter = iter(keys)

    # nn.Embedding default: N(0, 1)
    for name, n_cat in context_vars.items():
        params["emb"][name] = jax.random.normal(
            next(k_iter), (n_cat, embedding_dim), dtype=jnp.float32)

    def linear_init(k, fan_in, fan_out):
        kw, kb = jax.random.split(k)
        bound = 1.0 / jnp.sqrt(fan_in)
        w = jax.random.uniform(kw, (fan_in, fan_out), jnp.float32, -bound, bound)
        b = jax.random.uniform(kb, (fan_out,), jnp.float32, -bound, bound)
        return w, b

    params["w1"], params["b1"] = linear_init(next(k_iter), total_dim, hidden)
    params["w2"], params["b2"] = linear_init(next(k_iter), hidden, embedding_dim)

    for name, n_cat in context_vars.items():
        params["heads"][name] = linear_init(next(k_iter), embedding_dim, n_cat)

    return params


def _reference_forward(context_indices, params, context_vars):
    """Pure-JAX f32 reference of the PyTorch module for a tolerance check."""
    embs = [params["emb"][n][context_indices[n].astype(jnp.int32)]
            for n in context_vars]
    x = jnp.concatenate(embs, axis=1)
    h = jnp.maximum(jnp.dot(x, params["w1"]) + params["b1"], 0.0)
    emb = jnp.dot(h, params["w2"]) + params["b2"]
    logits = {n: jnp.dot(emb, params["heads"][n][0]) + params["heads"][n][1]
              for n in context_vars}
    return emb, logits


if __name__ == "__main__":
    # Small, deterministic example config (module hard-codes hidden=128).
    context_vars = {"weekday": 7, "month": 12, "building_type": 5}
    embedding_dim = 16
    batch = 8

    key = jax.random.PRNGKey(0)
    k_params, k_w, k_m, k_b = jax.random.split(key, 4)

    params = init_params(k_params, context_vars, embedding_dim)
    fused = prepare_fused_params(params, context_vars)   # once, reused per forward

    context_indices = {
        "weekday": jax.random.randint(k_w, (batch,), 0, 7, dtype=jnp.int32),
        "month": jax.random.randint(k_m, (batch,), 0, 12, dtype=jnp.int32),
        "building_type": jax.random.randint(k_b, (batch,), 0, 5, dtype=jnp.int32),
    }

    embedding, logits = context_module_forward(context_indices, fused)
    jax.block_until_ready(embedding)
    for name in context_vars:
        jax.block_until_ready(logits[name])

    assert embedding.shape == (batch, embedding_dim)
    for name, n_cat in context_vars.items():
        assert logits[name].shape == (batch, n_cat)

    # Tolerance absorbs (a) head/table fusion re-association and (b) bf16 MXU
    # operands (accumulation is f32); expected error ~1e-3, allowance 2e-2.
    ref_emb, ref_logits = _reference_forward(context_indices, params, context_vars)
    assert jnp.allclose(embedding, ref_emb, atol=2e-2, rtol=2e-2)
    for name in context_vars:
        assert jnp.allclose(logits[name], ref_logits[name], atol=2e-2, rtol=2e-2)

    print("KERNEL_OK")
</pallas_src>

<mosaic_0001>
module attributes {stable_mosaic.version = 11 : i64} {
  func.func @kernel(%arg0: i32, %arg1: memref<8x3xi32, #tpu.memory_space<vmem>>, %arg2: memref<32x128xbf16, #tpu.memory_space<vmem>>, %arg3: memref<1x128xf32, #tpu.memory_space<vmem>>, %arg4: memref<128x128xbf16, #tpu.memory_space<vmem>>, %arg5: memref<1x128xf32, #tpu.memory_space<vmem>>, %arg6: memref<8x128xf32, #tpu.memory_space<vmem>>) attributes {dimension_semantics = [#tpu.dimension_semantics<parallel>], iteration_bounds = array<i64: 1>, scalar_prefetch = 0 : i64, scratch_operands = 0 : i64, tpu.core_type = #tpu.core_type<tc>, window_params = [{transform_indices = @transform_0, window_bounds = array<i64: 8, 3>}, {pipeline_mode = #tpu.pipeline_mode<synchronous>, transform_indices = @transform_1, window_bounds = array<i64: 32, 128>}, {pipeline_mode = #tpu.pipeline_mode<synchronous>, transform_indices = @transform_2, window_bounds = array<i64: 1, 128>}, {pipeline_mode = #tpu.pipeline_mode<synchronous>, transform_indices = @transform_3, window_bounds = array<i64: 128, 128>}, {pipeline_mode = #tpu.pipeline_mode<synchronous>, transform_indices = @transform_4, window_bounds = array<i64: 1, 128>}, {transform_indices = @transform_5, window_bounds = array<i64: 8, 128>}]} {
    %c0 = arith.constant 0 : index
    %c0_0 = arith.constant 0 : index
    %0 = vector.load %arg1[%c0, %c0_0] : memref<8x3xi32, #tpu.memory_space<vmem>>, vector<8x3xi32>
    %1 = tpu.iota {dimensions = array<i32: 1>} : vector<8x32xi32>
    %cst = arith.constant 0.000000e+00 : f32
    %2 = vector.broadcast %cst : f32 to vector<8x32xf32>
    %3 = vector.extract_strided_slice %0 {offsets = [0, 0], sizes = [8, 1], strides = [1, 1]} : vector<8x3xi32> to vector<8x1xi32>
    %c0_i32 = arith.constant 0 : i32
    %4 = vector.broadcast %c0_i32 : i32 to vector<8x1xi32>
    %5 = arith.addi %3, %4 : vector<8x1xi32>
    %6 = vector.broadcast %5 : vector<8x1xi32> to vector<8x32xi32>
    %7 = arith.cmpi eq, %1, %6 : vector<8x32xi32>
    %8 = arith.extui %7 : vector<8x32xi1> to vector<8x32xi32>
    %9 = arith.sitofp %8 : vector<8x32xi32> to vector<8x32xf32>
    %10 = arith.addf %2, %9 : vector<8x32xf32>
    %11 = vector.extract_strided_slice %0 {offsets = [0, 1], sizes = [8, 1], strides = [1, 1]} : vector<8x3xi32> to vector<8x1xi32>
    %c7_i32 = arith.constant 7 : i32
    %12 = vector.broadcast %c7_i32 : i32 to vector<8x1xi32>
    %13 = arith.addi %11, %12 : vector<8x1xi32>
    %14 = vector.broadcast %13 : vector<8x1xi32> to vector<8x32xi32>
    %15 = arith.cmpi eq, %1, %14 : vector<8x32xi32>
    %16 = arith.extui %15 : vector<8x32xi1> to vector<8x32xi32>
    %17 = arith.sitofp %16 : vector<8x32xi32> to vector<8x32xf32>
    %18 = arith.addf %10, %17 : vector<8x32xf32>
    %19 = vector.extract_strided_slice %0 {offsets = [0, 2], sizes = [8, 1], strides = [1, 1]} : vector<8x3xi32> to vector<8x1xi32>
    %c19_i32 = arith.constant 19 : i32
    %20 = vector.broadcast %c19_i32 : i32 to vector<8x1xi32>
    %21 = arith.addi %19, %20 : vector<8x1xi32>
    %22 = vector.broadcast %21 : vector<8x1xi32> to vector<8x32xi32>
    %23 = arith.cmpi eq, %1, %22 : vector<8x32xi32>
    %24 = arith.extui %23 : vector<8x32xi1> to vector<8x32xi32>
    %25 = arith.sitofp %24 : vector<8x32xi32> to vector<8x32xf32>
    %26 = arith.addf %18, %25 : vector<8x32xf32>
    %27 = arith.truncf %26 : vector<8x32xf32> to vector<8x32xbf16>
    %c0_1 = arith.constant 0 : index
    %c0_2 = arith.constant 0 : index
    %28 = vector.load %arg2[%c0_1, %c0_2] : memref<32x128xbf16, #tpu.memory_space<vmem>>, vector<32x128xbf16>
    %cst_3 = arith.constant dense<0.000000e+00> : vector<8x128xf32>
    %29 = tpu.matmul %27, %28, %cst_3 {dimension_numbers = #tpu.dot_dimension_numbers<[1], [0], [0], [1], [0, 0, 1, 1], [], []>} : vector<8x32xbf16>, vector<32x128xbf16>, vector<8x128xf32> -> vector<8x128xf32>
    %c0_4 = arith.constant 0 : index
    %c0_5 = arith.constant 0 : index
    %30 = vector.load %arg3[%c0_4, %c0_5] : memref<1x128xf32, #tpu.memory_space<vmem>>, vector<1x128xf32>
    %31 = vector.broadcast %30 : vector<1x128xf32> to vector<8x128xf32>
    %32 = arith.addf %29, %31 : vector<8x128xf32>
    %cst_6 = arith.constant 0.000000e+00 : f32
    %33 = vector.broadcast %cst_6 : f32 to vector<8x128xf32>
    %34 = arith.maximumf %32, %33 : vector<8x128xf32>
    %35 = arith.truncf %34 : vector<8x128xf32> to vector<8x128xbf16>
    %c0_7 = arith.constant 0 : index
    %c0_8 = arith.constant 0 : index
    %36 = vector.load %arg4[%c0_7, %c0_8] : memref<128x128xbf16, #tpu.memory_space<vmem>>, vector<128x128xbf16>
    %cst_9 = arith.constant dense<0.000000e+00> : vector<8x128xf32>
    %37 = tpu.matmul %35, %36, %cst_9 {dimension_numbers = #tpu.dot_dimension_numbers<[1], [0], [0], [1], [0, 0, 1, 1], [], []>} : vector<8x128xbf16>, vector<128x128xbf16>, vector<8x128xf32> -> vector<8x128xf32>
    %c0_10 = arith.constant 0 : index
    %c0_11 = arith.constant 0 : index
    %38 = vector.load %arg5[%c0_10, %c0_11] : memref<1x128xf32, #tpu.memory_space<vmem>>, vector<1x128xf32>
    %39 = vector.broadcast %38 : vector<1x128xf32> to vector<8x128xf32>
    %40 = arith.addf %37, %39 : vector<8x128xf32>
    %c0_12 = arith.constant 0 : index
    %c0_13 = arith.constant 0 : index
    %41 = vector.load %arg6[%c0_12, %c0_13] : memref<8x128xf32, #tpu.memory_space<vmem>>, vector<8x128xf32>
    tpu.vector_store %arg6[%c0_12, %c0_13], %40 {strides = array<i32>} : memref<8x128xf32, #tpu.memory_space<vmem>>, vector<8x128xf32>,
    return
  }
  func.func @transform_0(%arg0: i32) -> (i32, i32) {
    %c0_i32 = arith.constant 0 : i32
    %c0_i32_0 = arith.constant 0 : i32
    return %arg0, %c0_i32 : i32, i32
  }
  func.func @transform_1(%arg0: i32) -> (i32, i32) {
    %c0_i32 = arith.constant 0 : i32
    %c0_i32_0 = arith.constant 0 : i32
    %c0_i32_1 = arith.constant 0 : i32
    return %c0_i32, %c0_i32_0 : i32, i32
  }
  func.func @transform_2(%arg0: i32) -> (i32, i32) {
    %c0_i32 = arith.constant 0 : i32
    %c0_i32_0 = arith.constant 0 : i32
    %c0_i32_1 = arith.constant 0 : i32
    return %c0_i32, %c0_i32_0 : i32, i32
  }
  func.func @transform_3(%arg0: i32) -> (i32, i32) {
    %c0_i32 = arith.constant 0 : i32
    %c0_i32_0 = arith.constant 0 : i32
    %c0_i32_1 = arith.constant 0 : i32
    return %c0_i32, %c0_i32_0 : i32, i32
  }
  func.func @transform_4(%arg0: i32) -> (i32, i32) {
    %c0_i32 = arith.constant 0 : i32
    %c0_i32_0 = arith.constant 0 : i32
    %c0_i32_1 = arith.constant 0 : i32
    return %c0_i32, %c0_i32_0 : i32, i32
  }
  func.func @transform_5(%arg0: i32) -> (i32, i32) {
    %c0_i32 = arith.constant 0 : i32
    %c0_i32_0 = arith.constant 0 : i32
    return %arg0, %c0_i32 : i32, i32
  }
}

</mosaic_0001>

<llo_original>
// kernel: tpu_custom_call.1
$region0: #{tpu_custom_call.1}
  #allocation0 [shape = 'u32[]', space=smem, size = 0x4, offset = 0x4, fixed_abs, tag = 'smem constant byte address 0x4 - core index']
  #allocation1 [shape = 'u32[144,128]{1,0:T(1,128)}', space=vmem, size = 0x12000, scoped, tag = 'internal scratch']
  %s0 = inlined_call_operand.vmem [shape: s32[8,3], index: 0, kind: input, shape index: {}]
  %s1 = inlined_call_operand.hbm [shape: bf16[32,128], index: 1, kind: input, shape index: {}]
  %s2 = inlined_call_operand.vmem [shape: f32[1,128], index: 2, kind: input, shape index: {}]
  %s3 = inlined_call_operand.hbm [shape: bf16[128,128], index: 3, kind: input, shape index: {}]
  %s4 = inlined_call_operand.vmem [shape: f32[1,128], index: 4, kind: input, shape index: {}]
  %s5 = inlined_call_operand.hbm [shape: f32[8,128], index: 5, kind: output, shape index: {}]
  %s6 = sld [smem:[#allocation0]]
  $region38: #{tpu_custom_call.1} parent=0
    _
  %s8 = ssub.s32 1, %s6
  %s9 = scalar_select 0, %s8, %s6
  $region1: #{tpu_custom_call.1} parent=0
    #allocation2 [shape = 'u8[8192]{0}', space=vmem, size = 0x2000, scoped, tag = 'input window, operand 1, single buffered']
    #allocation3 [shape = 's32[1]{0}', space=sflag, size = 0x4, scoped, tag = 'scoped memory for tpu_custom_call.1']
    #allocation4 [shape = 's32[1]{0}', space=sflag, size = 0x4, scoped, tag = 'scoped memory for tpu_custom_call.1']
    #allocation5 [shape = 'u8[32768]{0}', space=vmem, size = 0x8000, scoped, tag = 'input window, operand 3, single buffered']
    #allocation6 [shape = 's32[1]{0}', space=sflag, size = 0x4, scoped, tag = 'scoped memory for tpu_custom_call.1']
    #allocation7 [shape = 'u8[4096]{0}', space=vmem, size = 0x1000, scoped, tag = 'output window, operand 0, single buffered']
    %10 = vsyncpa [#allocation3], 0
    %11 = vsyncpa [#allocation6], 0
    %12 = vsyncpa [#allocation4], 0
    // Predicated region
    $region2: #{tpu_custom_call.1} parent=1 // pred_check
      _
    $region3: #{tpu_custom_call.1} parent=1 // pred_check_branch
      %14 = sbr.rel (0) target = $region5
    $region4: #{tpu_custom_call.1} parent=1 // pred_region
      _
    $region5: #{tpu_custom_call.1} parent=1 // pred_fallthru
      _
    // Predicated region
    $region6: #{tpu_custom_call.1} parent=1 // pred_check
      _
    $region7: #{tpu_custom_call.1} parent=1 // pred_check_branch
      %16 = sbr.rel (0) target = $region9
    $region8: #{tpu_custom_call.1} parent=1 // pred_region
      %s18 = ssub.s32 256, 256
      %19 = vsyncadd [#allocation3], %s18
      %s20 = sshll.u32 [#allocation2], 4
      %s21 = int_to_ptr.vmem [resolvable:$true] %s20
      %26 = dma.hbm_to_vmem [thread:$0]  %s1, 256, %s21, [#allocation3], 64, 64, 4
    $region9: #{tpu_custom_call.1} parent=1 // pred_fallthru
      _
    // Predicated region
    $region10: #{tpu_custom_call.1} parent=1 // pred_check
      _
    $region11: #{tpu_custom_call.1} parent=1 // pred_check_branch
      %28 = sbr.rel (0) target = $region13
    $region12: #{tpu_custom_call.1} parent=1 // pred_region
      _
    $region13: #{tpu_custom_call.1} parent=1 // pred_fallthru
      _
    // Predicated region
    $region14: #{tpu_custom_call.1} parent=1 // pred_check
      _
    $region15: #{tpu_custom_call.1} parent=1 // pred_check_branch
      %30 = sbr.rel (0) target = $region17
    $region16: #{tpu_custom_call.1} parent=1 // pred_region
      %s32 = ssub.s32 1024, 1024
      %33 = vsyncadd [#allocation6], %s32
      %s34 = sshll.u32 [#allocation5], 4
      %s35 = int_to_ptr.vmem [resolvable:$true] %s34
      %40 = dma.hbm_to_vmem [thread:$0]  %s3, 1024, %s35, [#allocation6], 64, 64, 4
    $region17: #{tpu_custom_call.1} parent=1 // pred_fallthru
      _
    // Predicated region
    $region18: #{tpu_custom_call.1} parent=1 // pred_check
      _
    $region19: #{tpu_custom_call.1} parent=1 // pred_check_branch
      %42 = sbr.rel (0) target = $region21
    $region20: #{tpu_custom_call.1} parent=1 // pred_region
      _
    $region21: #{tpu_custom_call.1} parent=1 // pred_fallthru
      _
    // Predicated region
    $region22: #{tpu_custom_call.1} parent=1 // pred_check
      _
    $region23: #{tpu_custom_call.1} parent=1 // pred_check_branch
      %44 = sbr.rel (0) target = $region25
    $region24: #{tpu_custom_call.1} parent=1 // pred_region
      %45 = dma.done [#allocation3], 256
    $region25: #{tpu_custom_call.1} parent=1 // pred_fallthru
      _
    // Predicated region
    $region26: #{tpu_custom_call.1} parent=1 // pred_check
      _
    $region27: #{tpu_custom_call.1} parent=1 // pred_check_branch
      %47 = sbr.rel (0) target = $region29
    $region28: #{tpu_custom_call.1} parent=1 // pred_region
      %48 = dma.done [#allocation6], 1024
    $region29: #{tpu_custom_call.1} parent=1 // pred_fallthru
      _
    %v50 = vld [vmem:[%s0] sm:$0xff]
    %v51 = vlaneseq
    %v52 = vand.u32 %v51, 127
    %53 = vset.pattern.permute.xlu0 0
    %54 = vperm.xlu0 %53, %v50
    %v55 = vpop.permute.xlu0 %54
    %vm56 = vcmp.eq.s32.totalorder %v52, %v55
    %v57 = vsel %vm56, 1, 0
    %v58 = vcvt.s32.f32 %v57
    %v59 = vadd.f32 %v58, 0.0
    %v60 = vadd.s32 %v50, 7
    %61 = vset.pattern.permute.xlu0 1
    %62 = vperm.xlu0 %61, %v60
    %v63 = vpop.permute.xlu0 %62
    %vm64 = vcmp.eq.s32.totalorder %v52, %v63
    %v65 = vsel %vm64, 1, 0
    %v66 = vcvt.s32.f32 %v65
    %v67 = vadd.f32 %v59, %v66
    %v68 = vadd.s32 %v50, 19
    %69 = vset.pattern.permute.xlu0 2
    %70 = vperm.xlu0 %69, %v68
    %v71 = vpop.permute.xlu0 %70
    %vm72 = vcmp.eq.s32.totalorder %v52, %v71
    %v73 = vsel %vm72, 1, 0
    %v74 = vcvt.s32.f32 %v73
    %v75 = vadd.f32 %v67, %v74
    %v76 = vpack.c.bf16 %v75, %v75
    %v77 = vld [vmem:[#allocation2] sm:$0xf]
    %v78 = vld [vmem:[#allocation2 + $0x4] sm:$0xf]
    %v79 = vld [vmem:[#allocation2 + $0x8] sm:$0xf]
    %v80 = vld [vmem:[#allocation2 + $0xc] sm:$0xf]
    %v81 = vld [vmem:[%s2] sm:$0x1]
    %v83 = vlaneseq
    %v84 = vshrl.u32 %v83, 7
    %v85 = vsub.s32 0, %v84
    %v86 = vrot.slane %v81, %v85
    %v92 = vunpack.c.l.b16 %v77
    %v93 = vunpack.c.l.b16 %v78
    %v94 = vunpack.c.l.b16 %v79
    %v95 = vunpack.c.l.b16 %v80
    %v96 = vpack.c.b16 %v93, %v92
    %v97 = vpack.c.b16 %v95, %v94
    %vm100 = vcmask 261120
    %v102 = vsel %vm100, %v76, 0
    %104 = vmatprep.subr.bf16.mxu0 0
    %105 = vmatpush1.bf16.msra.mxu0 %v96
    %106 = vmatprep.subr.bf16.mxu0 0
    %107 = vmatpush1.bf16.msra.mxu0 %v97
    %108 = vmatprep.subr.bf16.mxu0 0
    %109 = vmatpush1.bf16.msra.mxu0 0
    %110 = vmatprep.subr.bf16.mxu0 0
    %111 = vmatpush1.bf16.msra.mxu0 0
    %112 = vmatprep.subr.bf16.mxu0 0
    %113 = vmatpush1.bf16.msra.mxu0 0
    %114 = vmatprep.subr.bf16.mxu0 0
    %115 = vmatpush1.bf16.msra.mxu0 0
    %116 = vmatprep.subr.bf16.mxu0 0
    %117 = vmatpush1.bf16.msra.mxu0 0
    %118 = vmatprep.subr.bf16.mxu0 0
    %119 = vmatpush1.bf16.msra.mxu0 0
    %120 = vmatprep.subr.bf16.mxu0 0
    %121 = vmatpush1.bf16.msra.mxu0 0
    %122 = vmatprep.subr.bf16.mxu0 0
    %123 = vmatpush1.bf16.msra.mxu0 0
    %124 = vmatprep.subr.bf16.mxu0 0
    %125 = vmatpush1.bf16.msra.mxu0 0
    %126 = vmatprep.subr.bf16.mxu0 0
    %127 = vmatpush1.bf16.msra.mxu0 0
    %128 = vmatprep.subr.bf16.mxu0 0
    %129 = vmatpush1.bf16.msra.mxu0 0
    %130 = vmatprep.subr.bf16.mxu0 0
    %131 = vmatpush1.bf16.msra.mxu0 0
    %132 = vmatprep.subr.bf16.mxu0 0
    %133 = vmatpush1.bf16.msra.mxu0 0
    %134 = vmatprep.subr.bf16.mxu0 0
    %135 = vmatpush1.bf16.msra.mxu0 0
    %136 = vmatprep.mubr.bf16.mxu0 0
    %137 = vmatmul.mubr.bf16.gmra.mrb[0].mxu0 %v102
    %v138 = vpop.f32.mrb[0].mxu0
    %v139 = vadd.f32 %v86, %v138
    %v140 = vpop.f32.mrb[0].mxu0
    %v141 = vpop.f32.mrb[0].mxu0
    %v142 = vpop.f32.mrb[0].mxu0
    %143 = vdwg.mxu0
    %v144 = vmax.f32 %v139, 0.0
    %v145 = vpack.c.bf16 %v144, %v144
    %v146 = vld [vmem:[#allocation5] sm:$0xf]
    %v147 = vld [vmem:[#allocation5 + $0x4] sm:$0xf]
    %v148 = vld [vmem:[#allocation5 + $0x8] sm:$0xf]
    %v149 = vld [vmem:[#allocation5 + $0xc] sm:$0xf]
    %v150 = vld [vmem:[#allocation5 + $0x10] sm:$0xf]
    %v151 = vld [vmem:[#allocation5 + $0x14] sm:$0xf]
    %v152 = vld [vmem:[#allocation5 + $0x18] sm:$0xf]
    %v153 = vld [vmem:[#allocation5 + $0x1c] sm:$0xf]
    %v154 = vld [vmem:[#allocation5 + $0x20] sm:$0xf]
    %v155 = vld [vmem:[#allocation5 + $0x24] sm:$0xf]
    %v156 = vld [vmem:[#allocation5 + $0x28] sm:$0xf]
    %v157 = vld [vmem:[#allocation5 + $0x2c] sm:$0xf]
    %v158 = vld [vmem:[#allocation5 + $0x30] sm:$0xf]
    %v159 = vld [vmem:[#allocation5 + $0x34] sm:$0xf]
    %v160 = vld [vmem:[#allocation5 + $0x38] sm:$0xf]
    %v161 = vld [vmem:[#allocation5 + $0x3c] sm:$0xf]
    %v162 = vld [vmem:[%s4] sm:$0x1]
    %v164 = vlaneseq
    %v165 = vshrl.u32 %v164, 7
    %v166 = vsub.s32 0, %v165
    %v167 = vrot.slane %v162, %v166
    %v185 = vunpack.c.l.b16 %v146
    %v186 = vunpack.c.l.b16 %v147
    %v187 = vunpack.c.l.b16 %v148
    %v188 = vunpack.c.l.b16 %v149
    %v189 = vunpack.c.l.b16 %v150
    %v190 = vunpack.c.l.b16 %v151
    %v191 = vunpack.c.l.b16 %v152
    %v192 = vunpack.c.l.b16 %v153
    %v193 = vunpack.c.l.b16 %v154
    %v194 = vunpack.c.l.b16 %v155
    %v195 = vunpack.c.l.b16 %v156
    %v196 = vunpack.c.l.b16 %v157
    %v197 = vunpack.c.l.b16 %v158
    %v198 = vunpack.c.l.b16 %v159
    %v199 = vunpack.c.l.b16 %v160
    %v200 = vunpack.c.l.b16 %v161
    %v201 = vpack.c.b16 %v186, %v185
    %v202 = vpack.c.b16 %v188, %v187
    %v203 = vpack.c.b16 %v190, %v189
    %v204 = vpack.c.b16 %v192, %v191
    %v205 = vpack.c.b16 %v194, %v193
    %v206 = vpack.c.b16 %v196, %v195
    %v207 = vpack.c.b16 %v198, %v197
    %v208 = vpack.c.b16 %v200, %v199
    %217 = vmatprep.subr.bf16.mxu0 0
    %218 = vmatpush1.bf16.msra.mxu0 %v201
    %219 = vmatprep.subr.bf16.mxu0 0
    %220 = vmatpush1.bf16.msra.mxu0 %v202
    %221 = vmatprep.subr.bf16.mxu0 0
    %222 = vmatpush1.bf16.msra.mxu0 %v203
    %223 = vmatprep.subr.bf16.mxu0 0
    %224 = vmatpush1.bf16.msra.mxu0 %v204
    %225 = vmatprep.subr.bf16.mxu0 0
    %226 = vmatpush1.bf16.msra.mxu0 %v205
    %227 = vmatprep.subr.bf16.mxu0 0
    %228 = vmatpush1.bf16.msra.mxu0 %v206
    %229 = vmatprep.subr.bf16.mxu0 0
    %230 = vmatpush1.bf16.msra.mxu0 %v207
    %231 = vmatprep.subr.bf16.mxu0 0
    %232 = vmatpush1.bf16.msra.mxu0 %v208
    %233 = vmatprep.subr.bf16.mxu0 0
    %234 = vmatpush1.bf16.msra.mxu0 0
    %235 = vmatprep.subr.bf16.mxu0 0
    %236 = vmatpush1.bf16.msra.mxu0 0
    %237 = vmatprep.subr.bf16.mxu0 0
    %238 = vmatpush1.bf16.msra.mxu0 0
    %239 = vmatprep.subr.bf16.mxu0 0
    %240 = vmatpush1.bf16.msra.mxu0 0
    %241 = vmatprep.subr.bf16.mxu0 0
    %242 = vmatpush1.bf16.msra.mxu0 0
    %243 = vmatprep.subr.bf16.mxu0 0
    %244 = vmatpush1.bf16.msra.mxu0 0
    %245 = vmatprep.subr.bf16.mxu0 0
    %246 = vmatpush1.bf16.msra.mxu0 0
    %247 = vmatprep.subr.bf16.mxu0 0
    %248 = vmatpush1.bf16.msra.mxu0 0
    %249 = vmatprep.mubr.bf16.mxu0 0
    %250 = vmatmul.mubr.bf16.gmra.mrb[0].mxu0 %v145
    %v251 = vpop.f32.mrb[0].mxu0
    %v252 = vadd.f32 %v167, %v251
    %v253 = vpop.f32.mrb[0].mxu0
    %v254 = vpop.f32.mrb[0].mxu0
    %v255 = vpop.f32.mrb[0].mxu0
    %256 = vdwg.mxu0
    %257 = vst [vmem:[#allocation7] sm:$0xff] %v252
    // Predicated region
    $region30: #{tpu_custom_call.1} parent=1 // pred_check
      _
    $region31: #{tpu_custom_call.1} parent=1 // pred_check_branch
      %259 = sbr.rel (0) target = $region33
    $region32: #{tpu_custom_call.1} parent=1 // pred_region
      %s261 = ssub.s32 128, 128
      %262 = vsyncadd [#allocation4], %s261
      %s264 = sshll.u32 [#allocation7], 4
      %s265 = int_to_ptr.vmem [resolvable:$true] %s264
      %267 = dma.vmem_to_hbm [thread:$0]  %s265, 128, %s5, [#allocation4]
    $region33: #{tpu_custom_call.1} parent=1 // pred_fallthru
      _
    // Predicated region
    $region34: #{tpu_custom_call.1} parent=1 // pred_check
      _
    $region35: #{tpu_custom_call.1} parent=1 // pred_check_branch
      %269 = sbr.rel (0) target = $region37
    $region36: #{tpu_custom_call.1} parent=1 // pred_region
      %270 = dma.done [#allocation4], 128
    $region37: #{tpu_custom_call.1} parent=1 // pred_fallthru
      _
    %271 = vsyncpa [#allocation3], 1
    %272 = vsyncpa [#allocation6], 1
    %273 = vsyncpa [#allocation4], 1

</llo_original>
